<compile_context>
chip_gen: v7x
topology: tpu7x:2x2x1
jax: 0.10.0
libtpu: 0.0.40
codegen_flags: <defaults>
</compile_context>

<pallas_src>
import functools
import math

import jax
import jax.numpy as jnp
from jax.experimental import pallas as pl
from jax.experimental.pallas import tpu as pltpu


def _layernorm_kernel(x_ref, w_ref, b_ref, o_ref, *, eps, hidden):
    # x_ref: (tile_rows, hidden); w_ref / b_ref: (1, hidden).
    x = x_ref[...].astype(jnp.float32)
    n = jnp.float32(hidden)

    mu = jnp.sum(x, axis=-1, keepdims=True) / n
    diff = x - mu

    # torch.std uses the unbiased estimator (ddof=1).
    # NOTE: hidden == 1 gives 0/0 = NaN, same as torch.std on a single element.
    var = jnp.sum(diff * diff, axis=-1, keepdims=True) / jnp.float32(hidden - 1)
    sigma = jnp.maximum(jnp.sqrt(var), jnp.float32(eps))

    # Exact reciprocal, but only on the (tile_rows, 1) column (negligible
    # cost); the per-element work is then a single multiply. No approximate
    # EUP reciprocal -> f32 parity with the PyTorch reference.
    inv = 1.0 / sigma

    w = w_ref[...].astype(jnp.float32)
    b = b_ref[...].astype(jnp.float32)
    o_ref[...] = (diff * inv * w + b).astype(o_ref.dtype)


def _vmem_capacity_bytes():
    try:
        info = pltpu.get_tpu_info()
        cap = getattr(info, "vmem_capacity_bytes", None)
        if cap:
            return int(cap)
    except Exception:
        pass
    # Conservative default (v7x has 64 MiB/TC; v5e/v6e have 128 MiB).
    return 64 * 1024 * 1024


def _choose_tile_rows(rows, hidden, itemsize, vmem_bytes):
    """Row-tile size: ~512-1024 rows while keeping the real VMEM footprint
    (double-buffered in/out blocks at the I/O dtype width + ~2 full-tile f32
    intermediates in the body) inside the budget, with enough grid steps for
    pipelining / megacore sharding."""
    # Per-row bytes: 2x double-buffered input + 2x double-buffered output
    # blocks + ~2 full-tile f32 temporaries (x.astype(f32), diff).
    per_row = hidden * (4 * itemsize + 2 * 4)
    budget = int(vmem_bytes * 0.4)
    t = budget // max(per_row, 1)
    t = max(8, (t // 8) * 8)
    t = min(t, 1024)  # >=512-row tiles already reach ~85% of the HBM roofline
    if rows >= 8 * 64:
        # Enough work: keep >= 8 grid steps (>= 4 per TensorCore on v7x) so
        # the software pipeline stays full and the row axis load-balances.
        t = min(t, max(8, (rows // (8 * 8)) * 8))
    # Never taller than the (8-rounded) row count.
    t = min(t, max(8, ((rows + 7) // 8) * 8))
    return t


def layer_norm(x, weight, bias, eps=1e-6, tile_rows=None):
    """x: (..., hidden). Returns same shape/dtype as x."""
    orig_shape = x.shape
    hidden = orig_shape[-1]
    rows = int(math.prod(orig_shape[:-1])) if len(orig_shape) > 1 else 1

    # Pure reshapes only — no pad / slice HBM round trips.
    x2 = x.reshape(rows, hidden)
    w2 = weight.reshape(1, hidden)
    b2 = bias.reshape(1, hidden)

    vmem_bytes = _vmem_capacity_bytes()
    itemsize = jnp.dtype(x.dtype).itemsize
    if tile_rows is None:
        tile_rows = _choose_tile_rows(rows, hidden, itemsize, vmem_bytes)
    tile_rows = max(8, (int(tile_rows) // 8) * 8)

    # Partial last block is fine: stats are per-row, OOB reads feed only the
    # OOB rows, and their writes are dropped by Pallas.
    grid = pl.cdiv(rows, tile_rows)

    kernel = functools.partial(_layernorm_kernel, eps=float(eps), hidden=hidden)

    # Request only what the kernel needs (+ headroom), not most of VMEM.
    block_bytes = tile_rows * hidden * (4 * itemsize + 2 * 4)
    param_bytes = 4 * hidden * 4
    vmem_limit = int(
        min(vmem_bytes * 0.6,
            max(2 * (block_bytes + param_bytes) + (2 << 20), 16 << 20))
    )

    out = pl.pallas_call(
        kernel,
        out_shape=jax.ShapeDtypeStruct((rows, hidden), x.dtype),
        grid_spec=pltpu.PrefetchScalarGridSpec(
            num_scalar_prefetch=0,
            grid=(grid,),
            in_specs=[
                # Last dim == full hidden dim (allowed by the (8,128) rule),
                # so no lane padding and no in-kernel masking are needed.
                pl.BlockSpec((tile_rows, hidden), lambda i: (i, 0)),
                pl.BlockSpec((1, hidden), lambda i: (0, 0)),
                pl.BlockSpec((1, hidden), lambda i: (0, 0)),
            ],
            out_specs=pl.BlockSpec((tile_rows, hidden), lambda i: (i, 0)),
        ),
        compiler_params=pltpu.CompilerParams(
            dimension_semantics=("parallel",),
            vmem_limit_bytes=vmem_limit,
        ),
    )(x2, w2, b2)

    return out.reshape(orig_shape)


if __name__ == "__main__":
    key = jax.random.PRNGKey(0)
    batch, seq, hidden = 2, 8, 32

    x = jax.random.normal(key, (batch, seq, hidden), dtype=jnp.float32)
    # Deterministic parameter init matching the module: ones / zeros.
    weight = jnp.ones((hidden,), dtype=jnp.float32)
    bias = jnp.zeros((hidden,), dtype=jnp.float32)
    eps = 1e-6

    out = layer_norm(x, weight, bias, eps=eps)
    out = jax.block_until_ready(out)

    # Reference in plain JAX (unbiased std, clamp(min=eps)).
    mu = jnp.mean(x, axis=-1, keepdims=True)
    sigma = jnp.maximum(jnp.std(x, axis=-1, keepdims=True, ddof=1), eps)
    ref = (x - mu) / sigma * weight + bias

    assert out.shape == x.shape and out.dtype == x.dtype
    # All ops in the kernel are exact (accurate sqrt + exact reciprocal), so
    # the result matches the reference to f32 rounding noise.
    assert jnp.allclose(out, ref, atol=1e-4, rtol=1e-4), "mismatch vs reference"

    print("KERNEL_OK")
</pallas_src>

<mosaic_0001>
module attributes {stable_mosaic.version = 11 : i64} {
  func.func @_layernorm_kernel(%arg0: i32, %arg1: memref<16x32xf32, #tpu.memory_space<vmem>>, %arg2: memref<1x32xf32, #tpu.memory_space<vmem>>, %arg3: memref<1x32xf32, #tpu.memory_space<vmem>>, %arg4: memref<16x32xf32, #tpu.memory_space<vmem>>) attributes {dimension_semantics = [#tpu.dimension_semantics<parallel>], iteration_bounds = array<i64: 1>, scalar_prefetch = 0 : i64, scratch_operands = 0 : i64, tpu.core_type = #tpu.core_type<tc>, window_params = [{transform_indices = @transform_0, window_bounds = array<i64: 16, 32>}, {pipeline_mode = #tpu.pipeline_mode<synchronous>, transform_indices = @transform_1, window_bounds = array<i64: 1, 32>}, {pipeline_mode = #tpu.pipeline_mode<synchronous>, transform_indices = @transform_2, window_bounds = array<i64: 1, 32>}, {transform_indices = @transform_3, window_bounds = array<i64: 16, 32>}]} {
    %c0 = arith.constant 0 : index
    %c0_0 = arith.constant 0 : index
    %0 = vector.load %arg1[%c0, %c0_0] : memref<16x32xf32, #tpu.memory_space<vmem>>, vector<16x32xf32>
    %cst = arith.constant dense<0.000000e+00> : vector<16xf32>
    %1 = vector.multi_reduction <add>, %0, %cst [1] : vector<16x32xf32> to vector<16xf32>
    %2 = vector.shape_cast %1 : vector<16xf32> to vector<16x1xf32>
    %cst_1 = arith.constant 3.200000e+01 : f32
    %3 = vector.broadcast %cst_1 : f32 to vector<16x1xf32>
    %4 = arith.divf %2, %3 : vector<16x1xf32>
    %5 = vector.broadcast %4 : vector<16x1xf32> to vector<16x32xf32>
    %6 = arith.subf %0, %5 : vector<16x32xf32>
    %7 = arith.mulf %6, %6 : vector<16x32xf32>
    %cst_2 = arith.constant dense<0.000000e+00> : vector<16xf32>
    %8 = vector.multi_reduction <add>, %7, %cst_2 [1] : vector<16x32xf32> to vector<16xf32>
    %9 = vector.shape_cast %8 : vector<16xf32> to vector<16x1xf32>
    %cst_3 = arith.constant 3.100000e+01 : f32
    %10 = vector.broadcast %cst_3 : f32 to vector<16x1xf32>
    %11 = arith.divf %9, %10 : vector<16x1xf32>
    %12 = math.sqrt %11 : vector<16x1xf32>
    %cst_4 = arith.constant 9.99999997E-7 : f32
    %13 = vector.broadcast %cst_4 : f32 to vector<16x1xf32>
    %14 = arith.maximumf %12, %13 : vector<16x1xf32>
    %cst_5 = arith.constant 1.000000e+00 : f32
    %15 = vector.broadcast %cst_5 : f32 to vector<16x1xf32>
    %16 = arith.divf %15, %14 : vector<16x1xf32>
    %c0_6 = arith.constant 0 : index
    %c0_7 = arith.constant 0 : index
    %17 = vector.load %arg2[%c0_6, %c0_7] : memref<1x32xf32, #tpu.memory_space<vmem>>, vector<1x32xf32>
    %c0_8 = arith.constant 0 : index
    %c0_9 = arith.constant 0 : index
    %18 = vector.load %arg3[%c0_8, %c0_9] : memref<1x32xf32, #tpu.memory_space<vmem>>, vector<1x32xf32>
    %19 = vector.broadcast %16 : vector<16x1xf32> to vector<16x32xf32>
    %20 = arith.mulf %6, %19 : vector<16x32xf32>
    %21 = vector.broadcast %17 : vector<1x32xf32> to vector<16x32xf32>
    %22 = arith.mulf %20, %21 : vector<16x32xf32>
    %23 = vector.broadcast %18 : vector<1x32xf32> to vector<16x32xf32>
    %24 = arith.addf %22, %23 : vector<16x32xf32>
    %c0_10 = arith.constant 0 : index
    %c0_11 = arith.constant 0 : index
    %25 = vector.load %arg4[%c0_10, %c0_11] : memref<16x32xf32, #tpu.memory_space<vmem>>, vector<16x32xf32>
    tpu.vector_store %arg4[%c0_10, %c0_11], %24 {strides = array<i32>} : memref<16x32xf32, #tpu.memory_space<vmem>>, vector<16x32xf32>,
    return
  }
  func.func @transform_0(%arg0: i32) -> (i32, i32) {
    %c0_i32 = arith.constant 0 : i32
    %c0_i32_0 = arith.constant 0 : i32
    return %arg0, %c0_i32 : i32, i32
  }
  func.func @transform_1(%arg0: i32) -> (i32, i32) {
    %c0_i32 = arith.constant 0 : i32
    %c0_i32_0 = arith.constant 0 : i32
    %c0_i32_1 = arith.constant 0 : i32
    return %c0_i32, %c0_i32_0 : i32, i32
  }
  func.func @transform_2(%arg0: i32) -> (i32, i32) {
    %c0_i32 = arith.constant 0 : i32
    %c0_i32_0 = arith.constant 0 : i32
    %c0_i32_1 = arith.constant 0 : i32
    return %c0_i32, %c0_i32_0 : i32, i32
  }
  func.func @transform_3(%arg0: i32) -> (i32, i32) {
    %c0_i32 = arith.constant 0 : i32
    %c0_i32_0 = arith.constant 0 : i32
    return %arg0, %c0_i32 : i32, i32
  }
}

</mosaic_0001>

<llo_original>
// kernel: tpu_custom_call.1
$region0: #{tpu_custom_call.1}
  #allocation0 [shape = 'u32[]', space=smem, size = 0x4, offset = 0x4, fixed_abs, tag = 'smem constant byte address 0x4 - core index']
  #allocation1 [shape = 'u32[144,128]{1,0:T(1,128)}', space=vmem, size = 0x12000, scoped, tag = 'internal scratch']
  %s0 = inlined_call_operand.hbm [shape: f32[16,32], index: 0, kind: input, shape index: {}]
  %s1 = inlined_call_operand.vmem [shape: f32[1,32], index: 1, kind: input, shape index: {}]
  %s2 = inlined_call_operand.vmem [shape: f32[1,32], index: 2, kind: input, shape index: {}]
  %s3 = inlined_call_operand.hbm [shape: f32[16,32], index: 3, kind: output, shape index: {}]
  %s4 = sld [smem:[#allocation0]]
  $region26: #{tpu_custom_call.1} parent=0
    _
  %s6 = ssub.s32 1, %s4
  %s7 = scalar_select 0, %s6, %s4
  $region1: #{tpu_custom_call.1} parent=0
    #allocation2 [shape = 'u8[8192]{0}', space=vmem, size = 0x2000, scoped, tag = 'input window, operand 0, single buffered']
    #allocation3 [shape = 's32[1]{0}', space=sflag, size = 0x4, scoped, tag = 'scoped memory for tpu_custom_call.1']
    #allocation4 [shape = 's32[1]{0}', space=sflag, size = 0x4, scoped, tag = 'scoped memory for tpu_custom_call.1']
    #allocation5 [shape = 'u8[8192]{0}', space=vmem, size = 0x2000, scoped, tag = 'output window, operand 0, single buffered']
    %8 = vsyncpa [#allocation3], 0
    %9 = vsyncpa [#allocation4], 0
    // Predicated region
    $region2: #{tpu_custom_call.1} parent=1 // pred_check
      _
    $region3: #{tpu_custom_call.1} parent=1 // pred_check_branch
      %11 = sbr.rel (0) target = $region5
    $region4: #{tpu_custom_call.1} parent=1 // pred_region
      %s13 = ssub.s32 256, 256
      %14 = vsyncadd [#allocation3], %s13
      %s15 = sshll.u32 [#allocation2], 4
      %s16 = int_to_ptr.vmem [resolvable:$true] %s15
      %21 = dma.hbm_to_vmem [thread:$0]  %s0, 256, %s16, [#allocation3], 128, 128, 8
    $region5: #{tpu_custom_call.1} parent=1 // pred_fallthru
      _
    // Predicated region
    $region6: #{tpu_custom_call.1} parent=1 // pred_check
      _
    $region7: #{tpu_custom_call.1} parent=1 // pred_check_branch
      %23 = sbr.rel (0) target = $region9
    $region8: #{tpu_custom_call.1} parent=1 // pred_region
      _
    $region9: #{tpu_custom_call.1} parent=1 // pred_fallthru
      _
    // Predicated region
    $region10: #{tpu_custom_call.1} parent=1 // pred_check
      _
    $region11: #{tpu_custom_call.1} parent=1 // pred_check_branch
      %25 = sbr.rel (0) target = $region13
    $region12: #{tpu_custom_call.1} parent=1 // pred_region
      _
    $region13: #{tpu_custom_call.1} parent=1 // pred_fallthru
      _
    // Predicated region
    $region14: #{tpu_custom_call.1} parent=1 // pred_check
      _
    $region15: #{tpu_custom_call.1} parent=1 // pred_check_branch
      %27 = sbr.rel (0) target = $region17
    $region16: #{tpu_custom_call.1} parent=1 // pred_region
      %28 = dma.done [#allocation3], 256
    $region17: #{tpu_custom_call.1} parent=1 // pred_fallthru
      _
    %v29 = vld [vmem:[#allocation2] sm:$0xff]
    %v30 = vld [vmem:[#allocation2 + $0x8] sm:$0xff]
    %vm31 = vcmask 261120
    %v32 = vsel %vm31, %v29, 0.0
    %33 = vadd.xlane.f32.xlu0 %v32
    %v34 = vpop.xlane.xlu0 %33
    %v35 = vsel %vm31, %v30, 0.0
    %36 = vadd.xlane.f32.xlu0 %v35
    %v37 = vpop.xlane.xlu0 %36
    %v38 = vrcp.pop 32.0
    %v39 = vmul.f32 %v34, %v38
    %v40 = vmul.f32 %v37, %v38
    %v41 = vsub.f32 %v29, %v39
    %v42 = vsub.f32 %v30, %v40
    %v43 = vmul.f32 %v41, %v41
    %v44 = vmul.f32 %v42, %v42
    %v45 = vsel %vm31, %v43, 0.0
    %46 = vadd.xlane.f32.xlu0 %v45
    %v47 = vpop.xlane.xlu0 %46
    %v48 = vsel %vm31, %v44, 0.0
    %49 = vadd.xlane.f32.xlu0 %v48
    %v50 = vpop.xlane.xlu0 %49
    %v51 = vrcp.pop 31.0
    %v52 = vmul.f32 %v47, %v51
    %v53 = vmul.f32 %v50, %v51
    %v54 = vrsqrt.pop %v52
    %v55 = vmul.f32 %v52, %v54
    %vm56 = vcmp.eq.f32.partialorder %v52, inf
    %v57 = vsel %vm56, %v52, %v55
    %vm58 = vcmp.eq.f32.partialorder %v52, 0.0
    %v59 = vand.u32 %v52, 2147483648
    %v60 = vsel %vm58, %v59, %v57
    %v61 = vrsqrt.pop %v53
    %v62 = vmul.f32 %v53, %v61
    %vm63 = vcmp.eq.f32.partialorder %v53, inf
    %v64 = vsel %vm63, %v53, %v62
    %vm65 = vcmp.eq.f32.partialorder %v53, 0.0
    %v66 = vand.u32 %v53, 2147483648
    %v67 = vsel %vm65, %v66, %v64
    %v68 = vmax.f32 %v60, 1e-06
    %v69 = vmax.f32 %v67, 1e-06
    %v70 = vrcp.pop %v68
    %v71 = vmul.f32 1.0, %v70
    %v72 = vrcp.pop %v69
    %v73 = vmul.f32 1.0, %v72
    %v74 = vld [vmem:[%s1] sm:$0x1]
    %v75 = vld [vmem:[%s2] sm:$0x1]
    %v76 = vmul.f32 %v41, %v71
    %v77 = vmul.f32 %v42, %v73
    %v79 = vlaneseq
    %v80 = vshrl.u32 %v79, 7
    %v81 = vsub.s32 0, %v80
    %v82 = vrot.slane %v74, %v81
    %v84 = vmul.f32 %v76, %v82
    %v85 = vmul.f32 %v77, %v82
    %v87 = vlaneseq
    %v88 = vshrl.u32 %v87, 7
    %v89 = vsub.s32 0, %v88
    %v90 = vrot.slane %v75, %v89
    %v92 = vadd.f32 %v84, %v90
    %v93 = vadd.f32 %v85, %v90
    %94 = vst.msk [vmem:[#allocation5] sm:$0xff] %vm31, %v92
    %95 = vst.msk [vmem:[#allocation5 + $0x8] sm:$0xff] %vm31, %v93
    // Predicated region
    $region18: #{tpu_custom_call.1} parent=1 // pred_check
      _
    $region19: #{tpu_custom_call.1} parent=1 // pred_check_branch
      %97 = sbr.rel (0) target = $region21
    $region20: #{tpu_custom_call.1} parent=1 // pred_region
      %s99 = ssub.s32 256, 256
      %100 = vsyncadd [#allocation4], %s99
      %s101 = sshll.u32 [#allocation5], 4
      %s102 = int_to_ptr.vmem [resolvable:$true] %s101
      %107 = dma.vmem_to_hbm [thread:$0]  %s102, 256, %s3, [#allocation4], 128, 128, 8
    $region21: #{tpu_custom_call.1} parent=1 // pred_fallthru
      _
    // Predicated region
    $region22: #{tpu_custom_call.1} parent=1 // pred_check
      _
    $region23: #{tpu_custom_call.1} parent=1 // pred_check_branch
      %109 = sbr.rel (0) target = $region25
    $region24: #{tpu_custom_call.1} parent=1 // pred_region
      %110 = dma.done [#allocation4], 256
    $region25: #{tpu_custom_call.1} parent=1 // pred_fallthru
      _
    %111 = vsyncpa [#allocation3], 1
    %112 = vsyncpa [#allocation4], 1

</llo_original>
